<compile_context>
chip_gen: v6e
topology: v6e:2x2x1
jax: 0.10.0
libtpu: 0.0.40
codegen_flags: <defaults>
</compile_context>

<pallas_src>
import jax
import jax.numpy as jnp
from jax import lax
from jax.experimental import pallas as pl
from jax.experimental.pallas import tpu as pltpu


def self_attention_kernel(x_ref, m_ref, kb_ref, wv_ref, bv_ref, gamma_ref,
                          out_ref):
    Bt, N, C = x_ref.shape
    gamma = gamma_ref[0, 0]                        # scalar, read from SMEM

    x_f32 = x_ref[...]                             # (Bt, N, C) f32 (exact residual)
    x_bf = x_f32.astype(jnp.bfloat16)
    x2 = x_bf.reshape(Bt * N, C)                   # batch fused into the MXU M-dim

    # Fused projections for all Bt images at once (bf16 in, f32 accumulate).
    #   xm = x @ (Wq Wk^T) + (bq Wk^T)   -> energy = xm @ x^T
    #   v  = x @ Wv + bv
    xm = jnp.dot(x2, m_ref[...], preferred_element_type=jnp.float32) + kb_ref[...]
    v = jnp.dot(x2, wv_ref[...], preferred_element_type=jnp.float32) + bv_ref[...]
    xm_bf = xm.astype(jnp.bfloat16)
    v_bf = v.astype(jnp.bfloat16)

    # Per-image attention.  Bt is a small static count; slices below start at
    # multiples of N (tile-aligned), so they are cheap views.
    for b in range(Bt):
        lo = b * N
        xm_b = xm_bf[lo:lo + N, :]
        x_b = x2[lo:lo + N, :]
        v_b = v_bf[lo:lo + N, :]

        # energy[i, j] = xm_b[i] . x_b[j]   (contract over C, no k^T copy)
        energy = lax.dot_general(
            xm_b, x_b, (((1,), (1,)), ((), ())),
            preferred_element_type=jnp.float32)                       # (N, N)

        # numerically-stable softmax over j (matches torch.softmax(dim=-1))
        energy = energy - jnp.max(energy, axis=-1, keepdims=True)
        p = jnp.exp(energy)
        inv = pl.reciprocal(jnp.sum(p, axis=-1, keepdims=True), approx=True)
        attn_bf = (p * inv).astype(jnp.bfloat16)

        # out[i, c] = sum_j attn[i, j] * v[j, c]  (== torch bmm(value, attn^T))
        o = jnp.dot(attn_bf, v_b, preferred_element_type=jnp.float32)  # (N, C)

        out_ref[b] = gamma * o + x_f32[b]                              # residual


def _pick_block_b(B, N, limit=8):
    """Images per grid step: amortize the ~0.35us per-step overhead, but keep
    >= 2 grid steps when possible so the "parallel" batch axis can use both
    v7x TensorCores."""
    if N % 16 != 0:          # keep in-kernel bf16 reshapes/slices tile-aligned
        return 1
    divisors = [d for d in range(1, min(B, limit) + 1) if B % d == 0]
    multi_step = [d for d in divisors if B // d >= 2]
    return max(multi_step) if multi_step else max(divisors)


def self_attention(x_nchw, wq, bq, wk, bk, wv, bv, gamma, *, block_b_limit=8):
    """x_nchw: (B, C, H, W) float32. 1x1-conv weights stored as (C_in, C_out)."""
    B, C, H, W = x_nchw.shape
    N = H * W
    Bt = _pick_block_b(B, N, block_b_limit)
    del bk  # i-only / constant bias terms cancel under softmax

    # Fold the Q/K projections:
    #   energy[i,j] = (x_i Wq + bq) . (x_j Wk + bk)
    #               = x_i (Wq Wk^T) x_j^T + (bq Wk^T) x_j^T + [terms const in j]
    # Only M = Wq Wk^T and kb = bq Wk^T are needed inside the kernel.
    m = wq @ wk.T                                    # (C, C)
    kb = bq @ wk.T                                   # (1, C)

    # NCHW -> (B, N, C): channels map to lanes for the in-kernel matmuls.
    x_nc = jnp.transpose(x_nchw.reshape(B, C, N), (0, 2, 1)).astype(jnp.float32)

    flops = int(B * (4 * N * C * C + 4 * N * N * C))
    transcendentals = int(B * (N * N + N))
    bytes_accessed = int(8 * B * N * C + 4 * C * C + 8 * C + 4)

    out_nc = pl.pallas_call(
        self_attention_kernel,
        out_shape=jax.ShapeDtypeStruct((B, N, C), jnp.float32),
        grid_spec=pltpu.PrefetchScalarGridSpec(
            num_scalar_prefetch=0,
            grid=(B // Bt,),
            in_specs=[
                pl.BlockSpec((Bt, N, C), lambda g: (g, 0, 0)),      # x (f32)
                pl.BlockSpec((C, C), lambda g: (0, 0)),             # Wq Wk^T (bf16)
                pl.BlockSpec((1, C), lambda g: (0, 0)),             # bq Wk^T (f32)
                pl.BlockSpec((C, C), lambda g: (0, 0)),             # Wv (bf16)
                pl.BlockSpec((1, C), lambda g: (0, 0)),             # bv (f32)
                pl.BlockSpec(memory_space=pltpu.MemorySpace.SMEM),  # gamma scalar
            ],
            out_specs=pl.BlockSpec((Bt, N, C), lambda g: (g, 0, 0)),
        ),
        compiler_params=pltpu.CompilerParams(
            dimension_semantics=("parallel",)),
        cost_estimate=pl.CostEstimate(
            flops=flops,
            transcendentals=transcendentals,
            bytes_accessed=bytes_accessed),
    )(x_nc,
      m.astype(jnp.bfloat16),
      kb.astype(jnp.float32),
      wv.astype(jnp.bfloat16),
      bv.astype(jnp.float32),
      gamma.astype(jnp.float32))

    # (B, N, C) -> NCHW
    return jnp.transpose(out_nc, (0, 2, 1)).reshape(B, C, H, W)


def ref_self_attention(x_nchw, wq, bq, wk, bk, wv, bv, gamma):
    """Pure-JAX f32 reference mirroring the PyTorch forward exactly."""
    B, C, H, W = x_nchw.shape
    N = H * W
    x_nc = jnp.transpose(x_nchw.reshape(B, C, N), (0, 2, 1))         # (B, N, C)
    q = x_nc @ wq + bq
    k = x_nc @ wk + bk
    v = x_nc @ wv + bv
    energy = jnp.einsum('bic,bjc->bij', q, k)
    attn = jax.nn.softmax(energy, axis=-1)
    out = jnp.einsum('bij,bjc->bic', attn, v)
    y = gamma[0, 0] * out + x_nc
    return jnp.transpose(y, (0, 2, 1)).reshape(B, C, H, W)


if __name__ == "__main__":
    B, C, H, W = 4, 32, 8, 8            # in_dim = 32  ->  query/key dim = 4
    Cq = C // 8

    key = jax.random.PRNGKey(0)
    kx, kq, kk, kv, kbq, kbk, kbv = jax.random.split(key, 7)

    x = jax.random.normal(kx, (B, C, H, W), dtype=jnp.float32)

    # Conv2d 1x1 weights (out, in, 1, 1) stored as (in, out) matrices.
    scale = 0.1
    wq = scale * jax.random.normal(kq, (C, Cq), dtype=jnp.float32)
    wk = scale * jax.random.normal(kk, (C, Cq), dtype=jnp.float32)
    wv = scale * jax.random.normal(kv, (C, C), dtype=jnp.float32)
    bq = scale * jax.random.normal(kbq, (1, Cq), dtype=jnp.float32)
    bk = scale * jax.random.normal(kbk, (1, Cq), dtype=jnp.float32)
    bv = scale * jax.random.normal(kbv, (1, C), dtype=jnp.float32)
    # nn.Parameter(torch.zeros(1)) initializes gamma to 0; use a nonzero value
    # so the attention path is actually exercised by the check.
    gamma = jnp.full((1, 1), 0.5, dtype=jnp.float32)

    out = self_attention(x, wq, bq, wk, bk, wv, bv, gamma)
    out = jax.block_until_ready(out)

    ref = ref_self_attention(x, wq, bq, wk, bk, wv, bv, gamma)
    assert out.shape == (B, C, H, W)
    # bf16 MXU operands (f32 accumulation) -> compare at a bf16 tolerance.
    assert jnp.allclose(out, ref, atol=2e-2, rtol=2e-2), "mismatch vs reference"

    print("KERNEL_OK")
</pallas_src>

<mosaic_0001>
module attributes {stable_mosaic.version = 11 : i64} {
  func.func @self_attention_kernel(%arg0: i32, %arg1: memref<2x64x32xf32, #tpu.memory_space<vmem>>, %arg2: memref<32x32xbf16, #tpu.memory_space<vmem>>, %arg3: memref<1x32xf32, #tpu.memory_space<vmem>>, %arg4: memref<32x32xbf16, #tpu.memory_space<vmem>>, %arg5: memref<1x32xf32, #tpu.memory_space<vmem>>, %arg6: memref<1x1xf32, #tpu.memory_space<smem>>, %arg7: memref<2x64x32xf32, #tpu.memory_space<vmem>>) attributes {dimension_semantics = [#tpu.dimension_semantics<parallel>], iteration_bounds = array<i64: 2>, scalar_prefetch = 0 : i64, scratch_operands = 0 : i64, tpu.core_type = #tpu.core_type<tc>, window_params = [{transform_indices = @transform_0, window_bounds = array<i64: 2, 64, 32>}, {pipeline_mode = #tpu.pipeline_mode<synchronous>, transform_indices = @transform_1, window_bounds = array<i64: 32, 32>}, {pipeline_mode = #tpu.pipeline_mode<synchronous>, transform_indices = @transform_2, window_bounds = array<i64: 1, 32>}, {pipeline_mode = #tpu.pipeline_mode<synchronous>, transform_indices = @transform_3, window_bounds = array<i64: 32, 32>}, {pipeline_mode = #tpu.pipeline_mode<synchronous>, transform_indices = @transform_4, window_bounds = array<i64: 1, 32>}, {transform_indices = @transform_5, window_bounds = array<i64: 1, 1>}, {transform_indices = @transform_6, window_bounds = array<i64: 2, 64, 32>}]} {
    %c0 = arith.constant 0 : index
    %c0_0 = arith.constant 0 : index
    %0 = memref.load %arg6[%c0, %c0_0] : memref<1x1xf32, #tpu.memory_space<smem>>
    %c0_1 = arith.constant 0 : index
    %c0_2 = arith.constant 0 : index
    %c0_3 = arith.constant 0 : index
    %1 = vector.load %arg1[%c0_1, %c0_2, %c0_3] : memref<2x64x32xf32, #tpu.memory_space<vmem>>, vector<2x64x32xf32>
    %2 = arith.truncf %1 : vector<2x64x32xf32> to vector<2x64x32xbf16>
    %3 = vector.shape_cast %2 : vector<2x64x32xbf16> to vector<128x32xbf16>
    %c0_4 = arith.constant 0 : index
    %c0_5 = arith.constant 0 : index
    %4 = vector.load %arg2[%c0_4, %c0_5] : memref<32x32xbf16, #tpu.memory_space<vmem>>, vector<32x32xbf16>
    %cst = arith.constant dense<0.000000e+00> : vector<128x32xf32>
    %5 = tpu.matmul %3, %4, %cst {dimension_numbers = #tpu.dot_dimension_numbers<[1], [0], [0], [1], [0, 0, 1, 1], [], []>} : vector<128x32xbf16>, vector<32x32xbf16>, vector<128x32xf32> -> vector<128x32xf32>
    %c0_6 = arith.constant 0 : index
    %c0_7 = arith.constant 0 : index
    %6 = vector.load %arg3[%c0_6, %c0_7] : memref<1x32xf32, #tpu.memory_space<vmem>>, vector<1x32xf32>
    %7 = vector.broadcast %6 : vector<1x32xf32> to vector<128x32xf32>
    %8 = arith.addf %5, %7 : vector<128x32xf32>
    %c0_8 = arith.constant 0 : index
    %c0_9 = arith.constant 0 : index
    %9 = vector.load %arg4[%c0_8, %c0_9] : memref<32x32xbf16, #tpu.memory_space<vmem>>, vector<32x32xbf16>
    %cst_10 = arith.constant dense<0.000000e+00> : vector<128x32xf32>
    %10 = tpu.matmul %3, %9, %cst_10 {dimension_numbers = #tpu.dot_dimension_numbers<[1], [0], [0], [1], [0, 0, 1, 1], [], []>} : vector<128x32xbf16>, vector<32x32xbf16>, vector<128x32xf32> -> vector<128x32xf32>
    %c0_11 = arith.constant 0 : index
    %c0_12 = arith.constant 0 : index
    %11 = vector.load %arg5[%c0_11, %c0_12] : memref<1x32xf32, #tpu.memory_space<vmem>>, vector<1x32xf32>
    %12 = vector.broadcast %11 : vector<1x32xf32> to vector<128x32xf32>
    %13 = arith.addf %10, %12 : vector<128x32xf32>
    %14 = arith.truncf %8 : vector<128x32xf32> to vector<128x32xbf16>
    %15 = arith.truncf %13 : vector<128x32xf32> to vector<128x32xbf16>
    %16 = vector.extract_strided_slice %14 {offsets = [0, 0], sizes = [64, 32], strides = [1, 1]} : vector<128x32xbf16> to vector<64x32xbf16>
    %17 = vector.extract_strided_slice %3 {offsets = [0, 0], sizes = [64, 32], strides = [1, 1]} : vector<128x32xbf16> to vector<64x32xbf16>
    %18 = vector.extract_strided_slice %15 {offsets = [0, 0], sizes = [64, 32], strides = [1, 1]} : vector<128x32xbf16> to vector<64x32xbf16>
    %cst_13 = arith.constant dense<0.000000e+00> : vector<64x64xf32>
    %19 = tpu.matmul %16, %17, %cst_13 {dimension_numbers = #tpu.dot_dimension_numbers<[1], [1], [0], [0], [0, 0, 1, 0], [], []>} : vector<64x32xbf16>, vector<64x32xbf16>, vector<64x64xf32> -> vector<64x64xf32>
    %cst_14 = arith.constant dense<0xFF800000> : vector<64xf32>
    %20 = vector.multi_reduction <maximumf>, %19, %cst_14 [1] : vector<64x64xf32> to vector<64xf32>
    %21 = vector.shape_cast %20 : vector<64xf32> to vector<64x1xf32>
    %22 = vector.broadcast %21 : vector<64x1xf32> to vector<64x64xf32>
    %23 = arith.subf %19, %22 : vector<64x64xf32>
    %24 = math.exp %23 : vector<64x64xf32>
    %cst_15 = arith.constant dense<0.000000e+00> : vector<64xf32>
    %25 = vector.multi_reduction <add>, %24, %cst_15 [1] : vector<64x64xf32> to vector<64xf32>
    %26 = vector.shape_cast %25 : vector<64xf32> to vector<64x1xf32>
    %27 = tpu.reciprocal %26 {approx = true} : vector<64x1xf32> -> vector<64x1xf32>
    %28 = vector.broadcast %27 : vector<64x1xf32> to vector<64x64xf32>
    %29 = arith.mulf %24, %28 : vector<64x64xf32>
    %30 = arith.truncf %29 : vector<64x64xf32> to vector<64x64xbf16>
    %cst_16 = arith.constant dense<0.000000e+00> : vector<64x32xf32>
    %31 = tpu.matmul %30, %18, %cst_16 {dimension_numbers = #tpu.dot_dimension_numbers<[1], [0], [0], [1], [0, 0, 1, 1], [], []>} : vector<64x64xbf16>, vector<64x32xbf16>, vector<64x32xf32> -> vector<64x32xf32>
    %32 = vector.broadcast %0 : f32 to vector<64x32xf32>
    %33 = arith.mulf %32, %31 : vector<64x32xf32>
    %34 = vector.extract_strided_slice %1 {offsets = [0, 0, 0], sizes = [1, 64, 32], strides = [1, 1, 1]} : vector<2x64x32xf32> to vector<1x64x32xf32>
    %35 = vector.shape_cast %34 : vector<1x64x32xf32> to vector<64x32xf32>
    %36 = arith.addf %33, %35 : vector<64x32xf32>
    %c0_17 = arith.constant 0 : index
    %c0_18 = arith.constant 0 : index
    %c0_19 = arith.constant 0 : index
    %37 = vector.load %arg7[%c0_17, %c0_18, %c0_19] : memref<2x64x32xf32, #tpu.memory_space<vmem>>, vector<1x64x32xf32>
    %38 = vector.shape_cast %37 : vector<1x64x32xf32> to vector<64x32xf32>
    %39 = vector.shape_cast %36 : vector<64x32xf32> to vector<1x64x32xf32>
    tpu.vector_store %arg7[%c0_17, %c0_18, %c0_19], %39 {strides = array<i32>} : memref<2x64x32xf32, #tpu.memory_space<vmem>>, vector<1x64x32xf32>,
    %40 = vector.extract_strided_slice %14 {offsets = [64, 0], sizes = [64, 32], strides = [1, 1]} : vector<128x32xbf16> to vector<64x32xbf16>
    %41 = vector.extract_strided_slice %3 {offsets = [64, 0], sizes = [64, 32], strides = [1, 1]} : vector<128x32xbf16> to vector<64x32xbf16>
    %42 = vector.extract_strided_slice %15 {offsets = [64, 0], sizes = [64, 32], strides = [1, 1]} : vector<128x32xbf16> to vector<64x32xbf16>
    %cst_20 = arith.constant dense<0.000000e+00> : vector<64x64xf32>
    %43 = tpu.matmul %40, %41, %cst_20 {dimension_numbers = #tpu.dot_dimension_numbers<[1], [1], [0], [0], [0, 0, 1, 0], [], []>} : vector<64x32xbf16>, vector<64x32xbf16>, vector<64x64xf32> -> vector<64x64xf32>
    %cst_21 = arith.constant dense<0xFF800000> : vector<64xf32>
    %44 = vector.multi_reduction <maximumf>, %43, %cst_21 [1] : vector<64x64xf32> to vector<64xf32>
    %45 = vector.shape_cast %44 : vector<64xf32> to vector<64x1xf32>
    %46 = vector.broadcast %45 : vector<64x1xf32> to vector<64x64xf32>
    %47 = arith.subf %43, %46 : vector<64x64xf32>
    %48 = math.exp %47 : vector<64x64xf32>
    %cst_22 = arith.constant dense<0.000000e+00> : vector<64xf32>
    %49 = vector.multi_reduction <add>, %48, %cst_22 [1] : vector<64x64xf32> to vector<64xf32>
    %50 = vector.shape_cast %49 : vector<64xf32> to vector<64x1xf32>
    %51 = tpu.reciprocal %50 {approx = true} : vector<64x1xf32> -> vector<64x1xf32>
    %52 = vector.broadcast %51 : vector<64x1xf32> to vector<64x64xf32>
    %53 = arith.mulf %48, %52 : vector<64x64xf32>
    %54 = arith.truncf %53 : vector<64x64xf32> to vector<64x64xbf16>
    %cst_23 = arith.constant dense<0.000000e+00> : vector<64x32xf32>
    %55 = tpu.matmul %54, %42, %cst_23 {dimension_numbers = #tpu.dot_dimension_numbers<[1], [0], [0], [1], [0, 0, 1, 1], [], []>} : vector<64x64xbf16>, vector<64x32xbf16>, vector<64x32xf32> -> vector<64x32xf32>
    %56 = vector.broadcast %0 : f32 to vector<64x32xf32>
    %57 = arith.mulf %56, %55 : vector<64x32xf32>
    %58 = vector.extract_strided_slice %1 {offsets = [1, 0, 0], sizes = [1, 64, 32], strides = [1, 1, 1]} : vector<2x64x32xf32> to vector<1x64x32xf32>
    %59 = vector.shape_cast %58 : vector<1x64x32xf32> to vector<64x32xf32>
    %60 = arith.addf %57, %59 : vector<64x32xf32>
    %c1 = arith.constant 1 : index
    %c0_24 = arith.constant 0 : index
    %c0_25 = arith.constant 0 : index
    %61 = vector.load %arg7[%c1, %c0_24, %c0_25] : memref<2x64x32xf32, #tpu.memory_space<vmem>>, vector<1x64x32xf32>
    %62 = vector.shape_cast %61 : vector<1x64x32xf32> to vector<64x32xf32>
    %63 = vector.shape_cast %60 : vector<64x32xf32> to vector<1x64x32xf32>
    tpu.vector_store %arg7[%c1, %c0_24, %c0_25], %63 {strides = array<i32>} : memref<2x64x32xf32, #tpu.memory_space<vmem>>, vector<1x64x32xf32>,
    return
  }
  func.func @transform_0(%arg0: i32) -> (i32, i32, i32) {
    %c0_i32 = arith.constant 0 : i32
    %c0_i32_0 = arith.constant 0 : i32
    %c0_i32_1 = arith.constant 0 : i32
    return %arg0, %c0_i32, %c0_i32_0 : i32, i32, i32
  }
  func.func @transform_1(%arg0: i32) -> (i32, i32) {
    %c0_i32 = arith.constant 0 : i32
    %c0_i32_0 = arith.constant 0 : i32
    %c0_i32_1 = arith.constant 0 : i32
    return %c0_i32, %c0_i32_0 : i32, i32
  }
  func.func @transform_2(%arg0: i32) -> (i32, i32) {
    %c0_i32 = arith.constant 0 : i32
    %c0_i32_0 = arith.constant 0 : i32
    %c0_i32_1 = arith.constant 0 : i32
    return %c0_i32, %c0_i32_0 : i32, i32
  }
  func.func @transform_3(%arg0: i32) -> (i32, i32) {
    %c0_i32 = arith.constant 0 : i32
    %c0_i32_0 = arith.constant 0 : i32
    %c0_i32_1 = arith.constant 0 : i32
    return %c0_i32, %c0_i32_0 : i32, i32
  }
  func.func @transform_4(%arg0: i32) -> (i32, i32) {
    %c0_i32 = arith.constant 0 : i32
    %c0_i32_0 = arith.constant 0 : i32
    %c0_i32_1 = arith.constant 0 : i32
    return %c0_i32, %c0_i32_0 : i32, i32
  }
  func.func @transform_5(%arg0: i32) -> (i32, i32) {
    %c0_i32 = arith.constant 0 : i32
    %c0_i32_0 = arith.constant 0 : i32
    %c0_i32_1 = arith.constant 0 : i32
    return %c0_i32, %c0_i32_0 : i32, i32
  }
  func.func @transform_6(%arg0: i32) -> (i32, i32, i32) {
    %c0_i32 = arith.constant 0 : i32
    %c0_i32_0 = arith.constant 0 : i32
    %c0_i32_1 = arith.constant 0 : i32
    return %arg0, %c0_i32, %c0_i32_0 : i32, i32, i32
  }
}

</mosaic_0001>

<llo_original>
// kernel: tpu_custom_call.1
$region0: #{tpu_custom_call.1}
  #allocation0 [shape = 'u32[]', space=smem, size = 0x4, offset = 0x4, fixed_abs, tag = 'smem constant byte address 0x4 - core index']
  #allocation1 [shape = 'u32[144,128]{1,0:T(1,128)}', space=vmem, size = 0x12000, scoped, tag = 'internal scratch']
  #allocation2 [shape = 'f32[1,1]{1,0:T(1,128)S(6)}', space=smem, size = 0x200, scoped, tag = 'scoped memory for tpu_custom_call.1']
  %s0 = inlined_call_operand.vmem [shape: f32[4,64,32], index: 0, kind: input, shape index: {}]
  %s1 = inlined_call_operand.vmem [shape: bf16[32,32], index: 1, kind: input, shape index: {}]
  %s2 = inlined_call_operand.vmem [shape: f32[1,32], index: 2, kind: input, shape index: {}]
  %s3 = inlined_call_operand.vmem [shape: bf16[32,32], index: 3, kind: input, shape index: {}]
  %s4 = inlined_call_operand.vmem [shape: f32[1,32], index: 4, kind: input, shape index: {}]
  %s5 = inlined_call_operand.<no memory space> [shape: f32[1,1], index: 5, kind: input, shape index: {}]
  %s6 = inlined_call_operand.vmem [shape: f32[4,64,32], index: 6, kind: output, shape index: {}]
  %s7 = sld [smem:[#allocation0]]
  $region57: #{tpu_custom_call.1} parent=0
    _
  %s9 = ssub.s32 1, %s7
  %s10 = scalar_select 0, %s9, %s7
  %11 = sst [smem:[#allocation2]] %s5
  loop: start=0, step=1, limit=4
  $region2: #{tpu_custom_call.1} parent=0 // loop_pre_header
    _
  $region3: #{tpu_custom_call.1} parent=0 // loop_header
    %s13 = sphi 0, %s17
    %p14 = scmp.ge.s32.totalorder %s13, 4
    %s23 = sphi 0, %s25
    %s26 = sphi 0, %s23
    %s27 = sphi 0, %s26
    %s43 = sphi 0, %s27
    %s47 = sphi 0, %s47
    %s49 = sphi 0, %s47
    %s50 = sphi 0, %s49
    %s64 = sphi 0, %s50
    %s68 = sphi 0, %s68
    %s70 = sphi 0, %s68
    %s71 = sphi 0, %s70
    %s85 = sphi 0, %s71
    %s89 = sphi 0, %s89
    %s91 = sphi 0, %s89
    %s92 = sphi 0, %s91
    %s106 = sphi 0, %s92
    %s110 = sphi 0, %s110
    %s112 = sphi 0, %s110
    %s113 = sphi 0, %s112
    %s127 = sphi 0, %s113
    %s131 = sphi 0, %s131
    %s133 = sphi 0, %s131
    %s134 = sphi 0, %s133
    %s148 = sphi 0, %s134
    %s154 = sphi 0, %s156
    %s157 = sphi 0, %s154
    %s158 = sphi 0, %s157
    %s174 = sphi 0, %s158
  $region4: #{tpu_custom_call.1} parent=0 // loop_header_branch
    %16 = sbr.rel (%p14) target = $region8
  $region5: #{tpu_custom_call.1} parent=0 // loop_body
    %s18 = ssub.s32 %s13, 1
    %s19 = ssub.s32 %s13, 2
    %s20 = sadd.s32 %s13, 1
    %s21 = ssub.s32 %s13, %s20
    %p22 = scmp.eq.s32.totalorder %s21, 0
    %s24 = sadd.s32 %s23, 1
    %s25 = scalar_select %p22, %s23, %s24
    %p28 = pneg %p22
    %p29 = scmp.eq.s32.totalorder %s13, 1
    %p30 = por %p28, %p29
    %p31 = scmp.ne.s32.totalorder %s23, %s26
    %p32 = scmp.eq.s32.totalorder %s13, 0
    %p33 = por %p31, %p32
    %p34 = scmp.ne.s32.totalorder %s23, %s26
    %p35 = scmp.eq.s32.totalorder %s18, 1
    %p36 = por %p34, %p35
    %p37 = scmp.ne.s32.totalorder %s26, %s27
    %p38 = scmp.eq.s32.totalorder %s18, 0
    %p39 = por %p37, %p38
    %p40 = scmp.ne.s32.totalorder %s26, %s27
    %p41 = scmp.eq.s32.totalorder %s19, 1
    %p42 = por %p40, %p41
    %p44 = scmp.ne.s32.totalorder %s27, %s43
    %p45 = scmp.eq.s32.totalorder %s19, 0
    %p46 = por %p44, %p45
    %s48 = sadd.s32 %s47, 1
    %p51 = scmp.eq.s32.totalorder %s13, 1
    %p52 = scmp.ne.s32.totalorder %s47, %s49
    %p53 = scmp.eq.s32.totalorder %s13, 0
    %p54 = por %p52, %p53
    %p55 = scmp.ne.s32.totalorder %s47, %s49
    %p56 = scmp.eq.s32.totalorder %s18, 1
    %p57 = por %p55, %p56
    %p58 = scmp.ne.s32.totalorder %s49, %s50
    %p59 = scmp.eq.s32.totalorder %s18, 0
    %p60 = por %p58, %p59
    %p61 = scmp.ne.s32.totalorder %s49, %s50
    %p62 = scmp.eq.s32.totalorder %s19, 1
    %p63 = por %p61, %p62
    %p65 = scmp.ne.s32.totalorder %s50, %s64
    %p66 = scmp.eq.s32.totalorder %s19, 0
    %p67 = por %p65, %p66
    %s69 = sadd.s32 %s68, 1
    %p72 = scmp.eq.s32.totalorder %s13, 1
    %p73 = scmp.ne.s32.totalorder %s68, %s70
    %p74 = scmp.eq.s32.totalorder %s13, 0
    %p75 = por %p73, %p74
    %p76 = scmp.ne.s32.totalorder %s68, %s70
    %p77 = scmp.eq.s32.totalorder %s18, 1
    %p78 = por %p76, %p77
    %p79 = scmp.ne.s32.totalorder %s70, %s71
    %p80 = scmp.eq.s32.totalorder %s18, 0
    %p81 = por %p79, %p80
    %p82 = scmp.ne.s32.totalorder %s70, %s71
    %p83 = scmp.eq.s32.totalorder %s19, 1
    %p84 = por %p82, %p83
    %p86 = scmp.ne.s32.totalorder %s71, %s85
    %p87 = scmp.eq.s32.totalorder %s19, 0
    %p88 = por %p86, %p87
    %s90 = sadd.s32 %s89, 1
    %p93 = scmp.eq.s32.totalorder %s13, 1
    %p94 = scmp.ne.s32.totalorder %s89, %s91
    %p95 = scmp.eq.s32.totalorder %s13, 0
    %p96 = por %p94, %p95
    %p97 = scmp.ne.s32.totalorder %s89, %s91
    %p98 = scmp.eq.s32.totalorder %s18, 1
    %p99 = por %p97, %p98
    %p100 = scmp.ne.s32.totalorder %s91, %s92
    %p101 = scmp.eq.s32.totalorder %s18, 0
    %p102 = por %p100, %p101
    %p103 = scmp.ne.s32.totalorder %s91, %s92
    %p104 = scmp.eq.s32.totalorder %s19, 1
    %p105 = por %p103, %p104
    %p107 = scmp.ne.s32.totalorder %s92, %s106
    %p108 = scmp.eq.s32.totalorder %s19, 0
    %p109 = por %p107, %p108
    %s111 = sadd.s32 %s110, 1
    %p114 = scmp.eq.s32.totalorder %s13, 1
    %p115 = scmp.ne.s32.totalorder %s110, %s112
    %p116 = scmp.eq.s32.totalorder %s13, 0
    %p117 = por %p115, %p116
    %p118 = scmp.ne.s32.totalorder %s110, %s112
    %p119 = scmp.eq.s32.totalorder %s18, 1
    %p120 = por %p118, %p119
    %p121 = scmp.ne.s32.totalorder %s112, %s113
    %p122 = scmp.eq.s32.totalorder %s18, 0
    %p123 = por %p121, %p122
    %p124 = scmp.ne.s32.totalorder %s112, %s113
    %p125 = scmp.eq.s32.totalorder %s19, 1
    %p126 = por %p124, %p125
    %p128 = scmp.ne.s32.totalorder %s113, %s127
    %p129 = scmp.eq.s32.totalorder %s19, 0
    %p130 = por %p128, %p129
    %s132 = sadd.s32 %s131, 1
    %p135 = scmp.eq.s32.totalorder %s13, 1
    %p136 = scmp.ne.s32.totalorder %s131, %s133
    %p137 = scmp.eq.s32.totalorder %s13, 0
    %p138 = por %p136, %p137
    %p139 = scmp.ne.s32.totalorder %s131, %s133
    %p140 = scmp.eq.s32.totalorder %s18, 1
    %p141 = por %p139, %p140
    %p142 = scmp.ne.s32.totalorder %s133, %s134
    %p143 = scmp.eq.s32.totalorder %s18, 0
    %p144 = por %p142, %p143
    %p145 = scmp.ne.s32.totalorder %s133, %s134
    %p146 = scmp.eq.s32.totalorder %s19, 1
    %p147 = por %p145, %p146
    %p149 = scmp.ne.s32.totalorder %s134, %s148
    %p150 = scmp.eq.s32.totalorder %s19, 0
    %p151 = por %p149, %p150
    %s152 = ssub.s32 %s13, %s20
    %p153 = scmp.eq.s32.totalorder %s152, 0
    %s155 = sadd.s32 %s154, 1
    %s156 = scalar_select %p153, %s154, %s155
    %p159 = pneg %p153
    %p160 = scmp.eq.s32.totalorder %s13, 1
    %p161 = por %p159, %p160
    %p162 = scmp.ne.s32.totalorder %s154, %s157
    %p163 = scmp.eq.s32.totalorder %s13, 0
    %p164 = por %p162, %p163
    %p165 = scmp.ne.s32.totalorder %s154, %s157
    %p166 = scmp.eq.s32.totalorder %s18, 1
    %p167 = por %p165, %p166
    %p168 = scmp.ne.s32.totalorder %s157, %s158
    %p169 = scmp.eq.s32.totalorder %s18, 0
    %p170 = por %p168, %p169
    %p171 = scmp.ne.s32.totalorder %s157, %s158
    %p172 = scmp.eq.s32.totalorder %s19, 1
    %p173 = por %p171, %p172
    %p175 = scmp.ne.s32.totalorder %s158, %s174
    %p176 = scmp.eq.s32.totalorder %s19, 0
    %p177 = por %p175, %p176
    %p178 = scmp.le.s32.totalorder 1, %s13
    %p179 = scmp.lt.s32.totalorder %s13, 3
    %p180 = pnand %p178, %p179
    %p181 = pneg %p180
    // Predicated region
    $region9: #{tpu_custom_call.1} parent=5 // pred_check
      _
    $region10: #{tpu_custom_call.1} parent=5 // pred_check_branch
      %183 = sbr.rel (%p180) target = $region12
    $region11: #{tpu_custom_call.1} parent=5 // pred_region
      %s184 = ssub.s32 %s13, 1
      // Predicated region
      $region13: #{tpu_custom_call.1} parent=11 // pred_check
        %p185 = pneg %p60
      $region14: #{tpu_custom_call.1} parent=11 // pred_check_branch
        %187 = sbr.rel (%p185) target = $region16
      $region15: #{tpu_custom_call.1} parent=11 // pred_region
        _
      $region16: #{tpu_custom_call.1} parent=11 // pred_fallthru
        _
      // Predicated region
      $region17: #{tpu_custom_call.1} parent=11 // pred_check
        %p188 = pneg %p81
      $region18: #{tpu_custom_call.1} parent=11 // pred_check_branch
        %190 = sbr.rel (%p188) target = $region20
      $region19: #{tpu_custom_call.1} parent=11 // pred_region
        _
      $region20: #{tpu_custom_call.1} parent=11 // pred_fallthru
        _
      // Predicated region
      $region21: #{tpu_custom_call.1} parent=11 // pred_check
        %p191 = pneg %p102
      $region22: #{tpu_custom_call.1} parent=11 // pred_check_branch
        %193 = sbr.rel (%p191) target = $region24
      $region23: #{tpu_custom_call.1} parent=11 // pred_region
        _
      $region24: #{tpu_custom_call.1} parent=11 // pred_fallthru
        _
      // Predicated region
      $region25: #{tpu_custom_call.1} parent=11 // pred_check
        %p194 = pneg %p123
      $region26: #{tpu_custom_call.1} parent=11 // pred_check_branch
        %196 = sbr.rel (%p194) target = $region28
      $region27: #{tpu_custom_call.1} parent=11 // pred_region
        _
      $region28: #{tpu_custom_call.1} parent=11 // pred_fallthru
        _
      // Predicated region
      $region29: #{tpu_custom_call.1} parent=11 // pred_check
        %p197 = pneg %p144
      $region30: #{tpu_custom_call.1} parent=11 // pred_check_branch
        %199 = sbr.rel (%p197) target = $region32
      $region31: #{tpu_custom_call.1} parent=11 // pred_region
        _
      $region32: #{tpu_custom_call.1} parent=11 // pred_fallthru
        _
    $region12: #{tpu_custom_call.1} parent=5 // pred_fallthru
      _
    %p200 = scmp.lt.s32.totalorder %s13, 2
    // Predicated region
    $region33: #{tpu_custom_call.1} parent=5 // pred_check
      %p201 = pneg %p200
    $region34: #{tpu_custom_call.1} parent=5 // pred_check_branch
      %203 = sbr.rel (%p201) target = $region36
    $region35: #{tpu_custom_call.1} parent=5 // pred_region
      // Predicated region
      $region37: #{tpu_custom_call.1} parent=35 // pred_check
        %p204 = pneg %p33
      $region38: #{tpu_custom_call.1} parent=35 // pred_check_branch
        %206 = sbr.rel (%p204) target = $region40
      $region39: #{tpu_custom_call.1} parent=35 // pred_region
        %s207 = smul.u32 2, %s13
        %p208 = scmp.lt.s32.totalorder %s207, 3
        %s209 = scalar_select %p208, %s207, 3
        %s210 = smul.addr %s209, 8
        %s211 = smul.addr %s210, 8
        %s212 = scalar_lea.vmem %s0, %s211
        %s213 = smul.u32 2, %s13
      $region40: #{tpu_custom_call.1} parent=35 // pred_fallthru
        _
    $region36: #{tpu_custom_call.1} parent=5 // pred_fallthru
      _
    %p214 = scmp.le.s32.totalorder 1, %s13
    %p215 = scmp.lt.s32.totalorder %s13, 3
    %p216 = pnand %p214, %p215
    %p217 = pneg %p216
    // Predicated region
    $region41: #{tpu_custom_call.1} parent=5 // pred_check
      _
    $region42: #{tpu_custom_call.1} parent=5 // pred_check_branch
      %219 = sbr.rel (%p216) target = $region44
    $region43: #{tpu_custom_call.1} parent=5 // pred_region
      %s220 = ssub.s32 %s13, 1
      %s221 = smul.u32 2, %s18
      %p222 = scmp.lt.s32.totalorder %s221, 3
      %s223 = scalar_select %p222, %s221, 3
      %s224 = smul.addr %s223, 8
      %s225 = smul.addr %s224, 8
      %s226 = scalar_lea.vmem %s0, %s225
      %p227 = pneg %p39
      %p228 = pneg %p36
      %p229 = pneg %p60
      %p230 = pneg %p57
      %p231 = pneg %p81
      %p232 = pneg %p78
      %p233 = pneg %p102
      %p234 = pneg %p99
      %p235 = pneg %p123
      %p236 = pneg %p120
      %p237 = pneg %p144
      %p238 = pneg %p141
      %p239 = pneg %p170
      %p240 = pneg %p167
      %s241 = smul.u32 2, %s18
      %p242 = scmp.lt.s32.totalorder %s241, 3
      %s243 = scalar_select %p242, %s241, 3
      %s244 = smul.addr %s243, 8
      %s245 = smul.addr %s244, 8
      %s246 = scalar_lea.vmem %s6, %s245
      %s247 = smul.u32 2, %s18
      %p248 = scmp.lt.s32.totalorder %s247, 3
      %s249 = scalar_select %p248, %s247, 3
      %s250 = smul.addr %s249, 8
      %s251 = smul.addr %s250, 8
      %s252 = scalar_lea.vmem %s0, %s251
      %s253 = smul.u32 2, %s18
      %s254 = smul.u32 2, %s18
      %p255 = scmp.lt.s32.totalorder %s254, 3
      %s256 = scalar_select %p255, %s254, 3
      %s257 = smul.addr %s256, 8
      %s258 = smul.addr %s257, 8
      %s259 = scalar_lea.vmem %s6, %s258
      %s260 = smul.u32 2, %s18
      %s262 = sld [smem:[#allocation2]]
      %v263 = vld [vmem:[%s252] sm:$0xff]
      %v264 = vld [vmem:[%s252 + $0x8] sm:$0xff]
      %v265 = vld [vmem:[%s252 + $0x10] sm:$0xff]
      %v266 = vld [vmem:[%s252 + $0x18] sm:$0xff]
      %v267 = vld [vmem:[%s252 + $0x20] sm:$0xff]
      %v268 = vld [vmem:[%s252 + $0x28] sm:$0xff]
      %v269 = vld [vmem:[%s252 + $0x30] sm:$0xff]
      %v270 = vld [vmem:[%s252 + $0x38] sm:$0xff]
      %v271 = vld [vmem:[%s252 + $0x40] sm:$0xff]
      %v272 = vld [vmem:[%s252 + $0x48] sm:$0xff]
      %v273 = vld [vmem:[%s252 + $0x50] sm:$0xff]
      %v274 = vld [vmem:[%s252 + $0x58] sm:$0xff]
      %v275 = vld [vmem:[%s252 + $0x60] sm:$0xff]
      %v276 = vld [vmem:[%s252 + $0x68] sm:$0xff]
      %v277 = vld [vmem:[%s252 + $0x70] sm:$0xff]
      %v278 = vld [vmem:[%s252 + $0x78] sm:$0xff]
      %v279 = vpack.c.bf16 %v264, %v263
      %v280 = vpack.c.bf16 %v266, %v265
      %v281 = vpack.c.bf16 %v268, %v267
      %v282 = vpack.c.bf16 %v270, %v269
      %v283 = vpack.c.bf16 %v272, %v271
      %v284 = vpack.c.bf16 %v274, %v273
      %v285 = vpack.c.bf16 %v276, %v275
      %v286 = vpack.c.bf16 %v278, %v277
      %v287 = vld [vmem:[%s1] sm:$0xf]
      %v288 = vld [vmem:[%s1 + $0x4] sm:$0xf]
      %v289 = vld [vmem:[%s1 + $0x8] sm:$0xf]
      %v290 = vld [vmem:[%s1 + $0xc] sm:$0xf]
      %v291 = vld [vmem:[%s2] sm:$0x1]
      %v293 = vlaneseq
      %v294 = vshrl.u32 %v293, 7
      %v295 = vsub.s32 0, %v294
      %v296 = vrot.slane %v291, %v295
      %v302 = vunpack.c.l.b16 %v287
      %v303 = vunpack.c.l.b16 %v288
      %v304 = vunpack.c.l.b16 %v289
      %v305 = vunpack.c.l.b16 %v290
      %v306 = vpack.c.b16 %v303, %v302
      %v307 = vpack.c.b16 %v305, %v304
      %vm310 = vcmask 261120
      %v312 = vsel %vm310, %v279, 0
      %v315 = vsel %vm310, %v280, 0
      %v318 = vsel %vm310, %v281, 0
      %v321 = vsel %vm310, %v282, 0
      %v324 = vsel %vm310, %v283, 0
      %v327 = vsel %vm310, %v284, 0
      %v330 = vsel %vm310, %v285, 0
      %v333 = vsel %vm310, %v286, 0
      %335 = vmatprep.subr.bf16.mxu0 0
      %336 = vmatpush1.bf16.msra.mxu0 0
      %337 = vmatprep.subr.bf16.mxu0 0
      %338 = vmatpush1.bf16.msra.mxu0 0
      %339 = vmatprep.subr.bf16.mxu0 0
      %340 = vmatpush1.bf16.msra.mxu0 0
      %341 = vmatprep.subr.bf16.mxu0 0
      %342 = vmatpush1.bf16.msra.mxu0 0
      %343 = vmatprep.subr.bf16.mxu0 0
      %344 = vmatpush1.bf16.msra.mxu0 0
      %345 = vmatprep.subr.bf16.mxu0 0
      %346 = vmatpush1.bf16.msra.mxu0 0
      %347 = vmatprep.subr.bf16.mxu0 0
      %348 = vmatpush1.bf16.msra.mxu0 %v307
      %349 = vmatprep.subr.bf16.mxu0 0
      %350 = vmatpush1.bf16.msra.mxu0 %v306
      %351 = vmatprep.subr.bf16.mxu0 0
      %352 = vmatpush2.bf16.msra.mxu0 0
      %353 = vmatprep.subr.bf16.mxu0 0
      %354 = vmatpush2.bf16.msra.mxu0 0
      %355 = vmatprep.subr.bf16.mxu0 0
      %356 = vmatpush2.bf16.msra.mxu0 0
      %357 = vmatprep.subr.bf16.mxu0 0
      %358 = vmatpush2.bf16.msra.mxu0 0
      %359 = vmatprep.subr.bf16.mxu0 0
      %360 = vmatpush2.bf16.msra.mxu0 0
      %361 = vmatprep.subr.bf16.mxu0 0
      %362 = vmatpush2.bf16.msra.mxu0 0
      %363 = vmatprep.subr.bf16.mxu0 0
      %364 = vmatpush2.bf16.msra.mxu0 0
      %365 = vmatprep.subr.bf16.mxu0 0
      %366 = vmatpush2.bf16.msra.mxu0 0
      %367 = vmatprep.mubr.bf16.mxu0 0
      %368 = vmatmul.mubr.bf16.gmra.mxu0 %v312
      %v369 = vpop.f32.mrf.mxu0
      %v370 = vadd.f32 %v296, %v369
      %v371 = vpop.f32.mrf.mxu0
      %v372 = vpop.f32.mrf.mxu0
      %v373 = vadd.f32 %v296, %v372
      %v374 = vpop.f32.mrf.mxu0
      %375 = vmatprep.mubr.bf16.mxu0 0
      %376 = vmatmul.mubr.bf16.gmra.mxu0 %v315
      %v377 = vpop.f32.mrf.mxu0
      %v378 = vadd.f32 %v296, %v377
      %v379 = vpop.f32.mrf.mxu0
      %v380 = vpop.f32.mrf.mxu0
      %v381 = vadd.f32 %v296, %v380
      %v382 = vpop.f32.mrf.mxu0
      %383 = vmatprep.mubr.bf16.mxu0 0
      %384 = vmatmul.mubr.bf16.gmra.mxu0 %v318
      %v385 = vpop.f32.mrf.mxu0
      %v386 = vadd.f32 %v296, %v385
      %v387 = vpop.f32.mrf.mxu0
      %v388 = vpop.f32.mrf.mxu0
      %v389 = vadd.f32 %v296, %v388
      %v390 = vpop.f32.mrf.mxu0
      %391 = vmatprep.mubr.bf16.mxu0 0
      %392 = vmatmul.mubr.bf16.gmra.mxu0 %v321
      %v393 = vpop.f32.mrf.mxu0
      %v394 = vadd.f32 %v296, %v393
      %v395 = vpop.f32.mrf.mxu0
      %v396 = vpop.f32.mrf.mxu0
      %v397 = vadd.f32 %v296, %v396
      %v398 = vpop.f32.mrf.mxu0
      %399 = vmatprep.mubr.bf16.mxu0 0
      %400 = vmatmul.mubr.bf16.gmra.mxu0 %v324
      %v401 = vpop.f32.mrf.mxu0
      %v402 = vadd.f32 %v296, %v401
      %v403 = vpop.f32.mrf.mxu0
      %v404 = vpop.f32.mrf.mxu0
      %v405 = vadd.f32 %v296, %v404
      %v406 = vpop.f32.mrf.mxu0
      %407 = vmatprep.mubr.bf16.mxu0 0
      %408 = vmatmul.mubr.bf16.gmra.mxu0 %v327
      %v409 = vpop.f32.mrf.mxu0
      %v410 = vadd.f32 %v296, %v409
      %v411 = vpop.f32.mrf.mxu0
      %v412 = vpop.f32.mrf.mxu0
      %v413 = vadd.f32 %v296, %v412
      %v414 = vpop.f32.mrf.mxu0
      %415 = vmatprep.mubr.bf16.mxu0 0
      %416 = vmatmul.mubr.bf16.gmra.mxu0 %v330
      %v417 = vpop.f32.mrf.mxu0
      %v418 = vadd.f32 %v296, %v417
      %v419 = vpop.f32.mrf.mxu0
      %v420 = vpop.f32.mrf.mxu0
      %v421 = vadd.f32 %v296, %v420
      %v422 = vpop.f32.mrf.mxu0
      %423 = vmatprep.mubr.bf16.mxu0 0
      %424 = vmatmul.mubr.bf16.gmra.mxu0 %v333
      %v425 = vpop.f32.mrf.mxu0
      %v426 = vadd.f32 %v296, %v425
      %v427 = vpop.f32.mrf.mxu0
      %v428 = vpop.f32.mrf.mxu0
      %v429 = vadd.f32 %v296, %v428
      %v430 = vpop.f32.mrf.mxu0
      %431 = vdwg.mxu0
      %v432 = vld [vmem:[%s3] sm:$0xf]
      %v433 = vld [vmem:[%s3 + $0x4] sm:$0xf]
      %v434 = vld [vmem:[%s3 + $0x8] sm:$0xf]
      %v435 = vld [vmem:[%s3 + $0xc] sm:$0xf]
      %v436 = vld [vmem:[%s4] sm:$0x1]
      %v438 = vlaneseq
      %v439 = vshrl.u32 %v438, 7
      %v440 = vsub.s32 0, %v439
      %v441 = vrot.slane %v436, %v440
      %v447 = vunpack.c.l.b16 %v432
      %v448 = vunpack.c.l.b16 %v433
      %v449 = vunpack.c.l.b16 %v434
      %v450 = vunpack.c.l.b16 %v435
      %v451 = vpack.c.b16 %v448, %v447
      %v452 = vpack.c.b16 %v450, %v449
      %455 = vmatprep.subr.bf16.mxu0 0
      %456 = vmatpush1.bf16.msra.mxu0 0
      %457 = vmatprep.subr.bf16.mxu0 0
      %458 = vmatpush1.bf16.msra.mxu0 0
      %459 = vmatprep.subr.bf16.mxu0 0
      %460 = vmatpush1.bf16.msra.mxu0 0
      %461 = vmatprep.subr.bf16.mxu0 0
      %462 = vmatpush1.bf16.msra.mxu0 0
      %463 = vmatprep.subr.bf16.mxu0 0
      %464 = vmatpush1.bf16.msra.mxu0 0
      %465 = vmatprep.subr.bf16.mxu0 0
      %466 = vmatpush1.bf16.msra.mxu0 0
      %467 = vmatprep.subr.bf16.mxu0 0
      %468 = vmatpush1.bf16.msra.mxu0 %v452
      %469 = vmatprep.subr.bf16.mxu0 0
      %470 = vmatpush1.bf16.msra.mxu0 %v451
      %471 = vmatprep.subr.bf16.mxu0 0
      %472 = vmatpush2.bf16.msra.mxu0 0
      %473 = vmatprep.subr.bf16.mxu0 0
      %474 = vmatpush2.bf16.msra.mxu0 0
      %475 = vmatprep.subr.bf16.mxu0 0
      %476 = vmatpush2.bf16.msra.mxu0 0
      %477 = vmatprep.subr.bf16.mxu0 0
      %478 = vmatpush2.bf16.msra.mxu0 0
      %479 = vmatprep.subr.bf16.mxu0 0
      %480 = vmatpush2.bf16.msra.mxu0 0
      %481 = vmatprep.subr.bf16.mxu0 0
      %482 = vmatpush2.bf16.msra.mxu0 0
      %483 = vmatprep.subr.bf16.mxu0 0
      %484 = vmatpush2.bf16.msra.mxu0 0
      %485 = vmatprep.subr.bf16.mxu0 0
      %486 = vmatpush2.bf16.msra.mxu0 0
      %487 = vmatprep.mubr.bf16.mxu0 0
      %488 = vmatmul.mubr.bf16.gmra.mxu0 %v312
      %v489 = vpop.f32.mrf.mxu0
      %v490 = vadd.f32 %v441, %v489
      %v491 = vpop.f32.mrf.mxu0
      %v492 = vpop.f32.mrf.mxu0
      %v493 = vadd.f32 %v441, %v492
      %v494 = vpop.f32.mrf.mxu0
      %495 = vmatprep.mubr.bf16.mxu0 0
      %496 = vmatmul.mubr.bf16.gmra.mxu0 %v315
      %v497 = vpop.f32.mrf.mxu0
      %v498 = vadd.f32 %v441, %v497
      %v499 = vpop.f32.mrf.mxu0
      %v500 = vpop.f32.mrf.mxu0
      %v501 = vadd.f32 %v441, %v500
      %v502 = vpop.f32.mrf.mxu0
      %503 = vmatprep.mubr.bf16.mxu0 0
      %504 = vmatmul.mubr.bf16.gmra.mxu0 %v318
      %v505 = vpop.f32.mrf.mxu0
      %v506 = vadd.f32 %v441, %v505
      %v507 = vpop.f32.mrf.mxu0
      %v508 = vpop.f32.mrf.mxu0
      %v509 = vadd.f32 %v441, %v508
      %v510 = vpop.f32.mrf.mxu0
      %511 = vmatprep.mubr.bf16.mxu0 0
      %512 = vmatmul.mubr.bf16.gmra.mxu0 %v321
      %v513 = vpop.f32.mrf.mxu0
      %v514 = vadd.f32 %v441, %v513
      %v515 = vpop.f32.mrf.mxu0
      %v516 = vpop.f32.mrf.mxu0
      %v517 = vadd.f32 %v441, %v516
      %v518 = vpop.f32.mrf.mxu0
      %519 = vmatprep.mubr.bf16.mxu0 0
      %520 = vmatmul.mubr.bf16.gmra.mxu0 %v324
      %v521 = vpop.f32.mrf.mxu0
      %v522 = vadd.f32 %v441, %v521
      %v523 = vpop.f32.mrf.mxu0
      %v524 = vpop.f32.mrf.mxu0
      %v525 = vadd.f32 %v441, %v524
      %v526 = vpop.f32.mrf.mxu0
      %527 = vmatprep.mubr.bf16.mxu0 0
      %528 = vmatmul.mubr.bf16.gmra.mxu0 %v327
      %v529 = vpop.f32.mrf.mxu0
      %v530 = vadd.f32 %v441, %v529
      %v531 = vpop.f32.mrf.mxu0
      %v532 = vpop.f32.mrf.mxu0
      %v533 = vadd.f32 %v441, %v532
      %v534 = vpop.f32.mrf.mxu0
      %535 = vmatprep.mubr.bf16.mxu0 0
      %536 = vmatmul.mubr.bf16.gmra.mxu0 %v330
      %v537 = vpop.f32.mrf.mxu0
      %v538 = vadd.f32 %v441, %v537
      %v539 = vpop.f32.mrf.mxu0
      %v540 = vpop.f32.mrf.mxu0
      %v541 = vadd.f32 %v441, %v540
      %v542 = vpop.f32.mrf.mxu0
      %543 = vmatprep.mubr.bf16.mxu0 0
      %544 = vmatmul.mubr.bf16.gmra.mxu0 %v333
      %v545 = vpop.f32.mrf.mxu0
      %v546 = vadd.f32 %v441, %v545
      %v547 = vpop.f32.mrf.mxu0
      %v548 = vpop.f32.mrf.mxu0
      %v549 = vadd.f32 %v441, %v548
      %v550 = vpop.f32.mrf.mxu0
      %551 = vdwg.mxu0
      %v552 = vpack.c.bf16 %v373, %v370
      %v553 = vpack.c.bf16 %v381, %v378
      %v554 = vpack.c.bf16 %v389, %v386
      %v555 = vpack.c.bf16 %v397, %v394
      %v556 = vpack.c.bf16 %v405, %v402
      %v557 = vpack.c.bf16 %v413, %v410
      %v558 = vpack.c.bf16 %v421, %v418
      %v559 = vpack.c.bf16 %v429, %v426
      %v560 = vpack.c.bf16 %v493, %v490
      %v561 = vpack.c.bf16 %v501, %v498
      %v562 = vpack.c.bf16 %v509, %v506
      %v563 = vpack.c.bf16 %v517, %v514
      %v564 = vpack.c.bf16 %v525, %v522
      %v565 = vpack.c.bf16 %v533, %v530
      %v566 = vpack.c.bf16 %v541, %v538
      %v567 = vpack.c.bf16 %v549, %v546
      %v569 = vsel %vm310, %v552, 0
      %v572 = vsel %vm310, %v553, 0
      %v575 = vsel %vm310, %v554, 0
      %v578 = vsel %vm310, %v555, 0
      %580 = vmatprep.subr.bf16.mxu0 0
      %581 = vmatpush1.bf16.xpose.msra.mxu0 0
      %582 = vmatprep.subr.bf16.mxu0 0
      %583 = vmatpush1.bf16.xpose.msra.mxu0 0
      %584 = vmatprep.subr.bf16.mxu0 0
      %585 = vmatpush1.bf16.xpose.msra.mxu0 0
      %586 = vmatprep.subr.bf16.mxu0 0
      %587 = vmatpush1.bf16.xpose.msra.mxu0 0
      %588 = vmatprep.subr.bf16.mxu0 0
      %589 = vmatpush1.bf16.xpose.msra.mxu0 %v321
      %590 = vmatprep.subr.bf16.mxu0 0
      %591 = vmatpush1.bf16.xpose.msra.mxu0 %v318
      %592 = vmatprep.subr.bf16.mxu0 0
      %593 = vmatpush1.bf16.xpose.msra.mxu0 %v315
      %594 = vmatprep.subr.bf16.mxu0 0
      %595 = vmatpush1.bf16.xpose.msra.mxu0 %v312
      %596 = vmatprep.subr.bf16.mxu0 0
      %597 = vmatpush2.bf16.xpose.msra.mxu0 0
      %598 = vmatprep.subr.bf16.mxu0 0
      %599 = vmatpush2.bf16.xpose.msra.mxu0 0
      %600 = vmatprep.subr.bf16.mxu0 0
      %601 = vmatpush2.bf16.xpose.msra.mxu0 0
      %602 = vmatprep.subr.bf16.mxu0 0
      %603 = vmatpush2.bf16.xpose.msra.mxu0 0
      %604 = vmatprep.subr.bf16.mxu0 0
      %605 = vmatpush2.bf16.xpose.msra.mxu0 0
      %606 = vmatprep.subr.bf16.mxu0 0
      %607 = vmatpush2.bf16.xpose.msra.mxu0 0
      %608 = vmatprep.subr.bf16.mxu0 0
      %609 = vmatpush2.bf16.xpose.msra.mxu0 0
      %610 = vmatprep.subr.bf16.mxu0 0
      %611 = vmatpush2.bf16.xpose.msra.mxu0 0
      %612 = vmatprep.mubr.bf16.mxu0 0
      %613 = vmatmul.mubr.bf16.gmra.mxu0 %v569
      %v614 = vpop.f32.mrf.mxu0
      %v615 = vadd.f32 0.0, %v614
      %v616 = vpop.f32.mrf.mxu0
      %v617 = vpop.f32.mrf.mxu0
      %v618 = vadd.f32 0.0, %v617
      %v619 = vpop.f32.mrf.mxu0
      %620 = vmatprep.mubr.bf16.mxu0 0
      %621 = vmatmul.mubr.bf16.gmra.mxu0 %v572
      %v622 = vpop.f32.mrf.mxu0
      %v623 = vadd.f32 0.0, %v622
      %v624 = vpop.f32.mrf.mxu0
      %v625 = vpop.f32.mrf.mxu0
      %v626 = vadd.f32 0.0, %v625
      %v627 = vpop.f32.mrf.mxu0
      %628 = vmatprep.mubr.bf16.mxu0 0
      %629 = vmatmul.mubr.bf16.gmra.mxu0 %v575
      %v630 = vpop.f32.mrf.mxu0
      %v631 = vadd.f32 0.0, %v630
      %v632 = vpop.f32.mrf.mxu0
      %v633 = vpop.f32.mrf.mxu0
      %v634 = vadd.f32 0.0, %v633
      %v635 = vpop.f32.mrf.mxu0
      %636 = vmatprep.mubr.bf16.mxu0 0
      %637 = vmatmul.mubr.bf16.gmra.mxu0 %v578
      %v638 = vpop.f32.mrf.mxu0
      %v639 = vadd.f32 0.0, %v638
      %v640 = vpop.f32.mrf.mxu0
      %v641 = vpop.f32.mrf.mxu0
      %v642 = vadd.f32 0.0, %v641
      %v643 = vpop.f32.mrf.mxu0
      %644 = vdwg.mxu0
      %vm645 = vcmask 523264
      %v646 = vsel %vm645, %v615, -inf
      %647 = vmax.xlane.f32.xlu0 %v646
      %v648 = vpop.xlane.xlu0 %647
      %v649 = vsel %vm645, %v618, -inf
      %650 = vmax.xlane.f32.xlu0 %v649
      %v651 = vpop.xlane.xlu0 %650
      %v652 = vsel %vm645, %v623, -inf
      %653 = vmax.xlane.f32.xlu0 %v652
      %v654 = vpop.xlane.xlu0 %653
      %v655 = vsel %vm645, %v626, -inf
      %656 = vmax.xlane.f32.xlu0 %v655
      %v657 = vpop.xlane.xlu0 %656
      %v658 = vsel %vm645, %v631, -inf
      %659 = vmax.xlane.f32.xlu0 %v658
      %v660 = vpop.xlane.xlu0 %659
      %v661 = vsel %vm645, %v634, -inf
      %662 = vmax.xlane.f32.xlu0 %v661
      %v663 = vpop.xlane.xlu0 %662
      %v664 = vsel %vm645, %v639, -inf
      %665 = vmax.xlane.f32.xlu0 %v664
      %v666 = vpop.xlane.xlu0 %665
      %v667 = vsel %vm645, %v642, -inf
      %668 = vmax.xlane.f32.xlu0 %v667
      %v669 = vpop.xlane.xlu0 %668
      %v670 = vsub.f32 %v615, %v648
      %v671 = vsub.f32 %v618, %v651
      %v672 = vsub.f32 %v623, %v654
      %v673 = vsub.f32 %v626, %v657
      %v674 = vsub.f32 %v631, %v660
      %v675 = vsub.f32 %v634, %v663
      %v676 = vsub.f32 %v639, %v666
      %v677 = vsub.f32 %v642, %v669
      %v678 = vmul.f32 %v670, 1.442695
      %v679 = vpow.pop %v678
      %v680 = vmul.f32 %v671, 1.442695
      %v681 = vpow.pop %v680
      %v682 = vmul.f32 %v672, 1.442695
      %v683 = vpow.pop %v682
      %v684 = vmul.f32 %v673, 1.442695
      %v685 = vpow.pop %v684
      %v686 = vmul.f32 %v674, 1.442695
      %v687 = vpow.pop %v686
      %v688 = vmul.f32 %v675, 1.442695
      %v689 = vpow.pop %v688
      %v690 = vmul.f32 %v676, 1.442695
      %v691 = vpow.pop %v690
      %v692 = vmul.f32 %v677, 1.442695
      %v693 = vpow.pop %v692
      %v694 = vsel %vm645, %v679, 0.0
      %695 = vadd.xlane.f32.xlu0 %v694
      %v696 = vpop.xlane.xlu0 %695
      %v697 = vsel %vm645, %v681, 0.0
      %698 = vadd.xlane.f32.xlu0 %v697
      %v699 = vpop.xlane.xlu0 %698
      %v700 = vsel %vm645, %v683, 0.0
      %701 = vadd.xlane.f32.xlu0 %v700
      %v702 = vpop.xlane.xlu0 %701
      %v703 = vsel %vm645, %v685, 0.0
      %704 = vadd.xlane.f32.xlu0 %v703
      %v705 = vpop.xlane.xlu0 %704
      %v706 = vsel %vm645, %v687, 0.0
      %707 = vadd.xlane.f32.xlu0 %v706
      %v708 = vpop.xlane.xlu0 %707
      %v709 = vsel %vm645, %v689, 0.0
      %710 = vadd.xlane.f32.xlu0 %v709
      %v711 = vpop.xlane.xlu0 %710
      %v712 = vsel %vm645, %v691, 0.0
      %713 = vadd.xlane.f32.xlu0 %v712
      %v714 = vpop.xlane.xlu0 %713
      %v715 = vsel %vm645, %v693, 0.0
      %716 = vadd.xlane.f32.xlu0 %v715
      %v717 = vpop.xlane.xlu0 %716
      %v718 = vrcp.pop %v696
      %v719 = vrcp.pop %v699
      %v720 = vrcp.pop %v702
      %v721 = vrcp.pop %v705
      %v722 = vrcp.pop %v708
      %v723 = vrcp.pop %v711
      %v724 = vrcp.pop %v714
      %v725 = vrcp.pop %v717
      %v726 = vmul.f32 %v679, %v718
      %v727 = vmul.f32 %v681, %v719
      %v728 = vmul.f32 %v683, %v720
      %v729 = vmul.f32 %v685, %v721
      %v730 = vmul.f32 %v687, %v722
      %v731 = vmul.f32 %v689, %v723
      %v732 = vmul.f32 %v691, %v724
      %v733 = vmul.f32 %v693, %v725
      %v734 = vpack.c.bf16 %v727, %v726
      %v735 = vpack.c.bf16 %v729, %v728
      %v736 = vpack.c.bf16 %v731, %v730
      %v737 = vpack.c.bf16 %v733, %v732
      %v739 = vsel %vm645, %v734, 0
      %v742 = vsel %vm645, %v735, 0
      %v745 = vsel %vm645, %v736, 0
      %v748 = vsel %vm645, %v737, 0
      %750 = vmatprep.subr.bf16.mxu0 0
      %751 = vmatpush1.bf16.msra.mxu0 0
      %752 = vmatprep.subr.bf16.mxu0 0
      %753 = vmatpush1.bf16.msra.mxu0 0
      %754 = vmatprep.subr.bf16.mxu0 0
      %755 = vmatpush1.bf16.msra.mxu0 0
      %756 = vmatprep.subr.bf16.mxu0 0
      %757 = vmatpush1.bf16.msra.mxu0 0
      %758 = vmatprep.subr.bf16.mxu0 0
      %759 = vmatpush1.bf16.msra.mxu0 %v563
      %760 = vmatprep.subr.bf16.mxu0 0
      %761 = vmatpush1.bf16.msra.mxu0 %v562
      %762 = vmatprep.subr.bf16.mxu0 0
      %763 = vmatpush1.bf16.msra.mxu0 %v561
      %764 = vmatprep.subr.bf16.mxu0 0
      %765 = vmatpush1.bf16.msra.mxu0 %v560
      %766 = vmatprep.subr.bf16.mxu0 0
      %767 = vmatpush2.bf16.msra.mxu0 0
      %768 = vmatprep.subr.bf16.mxu0 0
      %769 = vmatpush2.bf16.msra.mxu0 0
      %770 = vmatprep.subr.bf16.mxu0 0
      %771 = vmatpush2.bf16.msra.mxu0 0
      %772 = vmatprep.subr.bf16.mxu0 0
      %773 = vmatpush2.bf16.msra.mxu0 0
      %774 = vmatprep.subr.bf16.mxu0 0
      %775 = vmatpush2.bf16.msra.mxu0 0
      %776 = vmatprep.subr.bf16.mxu0 0
      %777 = vmatpush2.bf16.msra.mxu0 0
      %778 = vmatprep.subr.bf16.mxu0 0
      %779 = vmatpush2.bf16.msra.mxu0 0
      %780 = vmatprep.subr.bf16.mxu0 0
      %781 = vmatpush2.bf16.msra.mxu0 0
      %782 = vmatprep.mubr.bf16.mxu0 0
      %783 = vmatmul.mubr.bf16.gmra.mxu0 %v739
      %v784 = vpop.f32.mrf.mxu0
      %v785 = vadd.f32 0.0, %v784
      %v786 = vpop.f32.mrf.mxu0
      %v787 = vpop.f32.mrf.mxu0
      %v788 = vadd.f32 0.0, %v787
      %v789 = vpop.f32.mrf.mxu0
      %790 = vmatprep.mubr.bf16.mxu0 0
      %791 = vmatmul.mubr.bf16.gmra.mxu0 %v742
      %v792 = vpop.f32.mrf.mxu0
      %v793 = vadd.f32 0.0, %v792
      %v794 = vpop.f32.mrf.mxu0
      %v795 = vpop.f32.mrf.mxu0
      %v796 = vadd.f32 0.0, %v795
      %v797 = vpop.f32.mrf.mxu0
      %798 = vmatprep.mubr.bf16.mxu0 0
      %799 = vmatmul.mubr.bf16.gmra.mxu0 %v745
      %v800 = vpop.f32.mrf.mxu0
      %v801 = vadd.f32 0.0, %v800
      %v802 = vpop.f32.mrf.mxu0
      %v803 = vpop.f32.mrf.mxu0
      %v804 = vadd.f32 0.0, %v803
      %v805 = vpop.f32.mrf.mxu0
      %806 = vmatprep.mubr.bf16.mxu0 0
      %807 = vmatmul.mubr.bf16.gmra.mxu0 %v748
      %v808 = vpop.f32.mrf.mxu0
      %v809 = vadd.f32 0.0, %v808
      %v810 = vpop.f32.mrf.mxu0
      %v811 = vpop.f32.mrf.mxu0
      %v812 = vadd.f32 0.0, %v811
      %v813 = vpop.f32.mrf.mxu0
      %814 = vdwg.mxu0
      %v815 = vstv %s262
      %v816 = vmul.f32 %v815, %v785
      %v817 = vmul.f32 %v815, %v788
      %v818 = vmul.f32 %v815, %v793
      %v819 = vmul.f32 %v815, %v796
      %v820 = vmul.f32 %v815, %v801
      %v821 = vmul.f32 %v815, %v804
      %v822 = vmul.f32 %v815, %v809
      %v823 = vmul.f32 %v815, %v812
      %v824 = vadd.f32 %v816, %v263
      %v825 = vadd.f32 %v817, %v264
      %v826 = vadd.f32 %v818, %v265
      %v827 = vadd.f32 %v819, %v266
      %v828 = vadd.f32 %v820, %v267
      %v829 = vadd.f32 %v821, %v268
      %v830 = vadd.f32 %v822, %v269
      %v831 = vadd.f32 %v823, %v270
      %832 = vst.msk [vmem:[%s259] sm:$0xff] %vm310, %v824
      %833 = vst.msk [vmem:[%s259 + $0x8] sm:$0xff] %vm310, %v825
      %834 = vst.msk [vmem:[%s259 + $0x10] sm:$0xff] %vm310, %v826
      %835 = vst.msk [vmem:[%s259 + $0x18] sm:$0xff] %vm310, %v827
      %836 = vst.msk [vmem:[%s259 + $0x20] sm:$0xff] %vm310, %v828
      %837 = vst.msk [vmem:[%s259 + $0x28] sm:$0xff] %vm310, %v829
      %838 = vst.msk [vmem:[%s259 + $0x30] sm:$0xff] %vm310, %v830
      %839 = vst.msk [vmem:[%s259 + $0x38] sm:$0xff] %vm310, %v831
      %v841 = vsel %vm310, %v556, 0
      %v844 = vsel %vm310, %v557, 0
      %v847 = vsel %vm310, %v558, 0
      %v850 = vsel %vm310, %v559, 0
      %852 = vmatprep.subr.bf16.mxu0 0
      %853 = vmatpush1.bf16.xpose.msra.mxu0 0
      %854 = vmatprep.subr.bf16.mxu0 0
      %855 = vmatpush1.bf16.xpose.msra.mxu0 0
      %856 = vmatprep.subr.bf16.mxu0 0
      %857 = vmatpush1.bf16.xpose.msra.mxu0 0
      %858 = vmatprep.subr.bf16.mxu0 0
      %859 = vmatpush1.bf16.xpose.msra.mxu0 0
      %860 = vmatprep.subr.bf16.mxu0 0
      %861 = vmatpush1.bf16.xpose.msra.mxu0 %v333
      %862 = vmatprep.subr.bf16.mxu0 0
      %863 = vmatpush1.bf16.xpose.msra.mxu0 %v330
      %864 = vmatprep.subr.bf16.mxu0 0
      %865 = vmatpush1.bf16.xpose.msra.mxu0 %v327
      %866 = vmatprep.subr.bf16.mxu0 0
      %867 = vmatpush1.bf16.xpose.msra.mxu0 %v324
      %868 = vmatprep.subr.bf16.mxu0 0
      %869 = vmatpush2.bf16.xpose.msra.mxu0 0
      %870 = vmatprep.subr.bf16.mxu0 0
      %871 = vmatpush2.bf16.xpose.msra.mxu0 0
      %872 = vmatprep.subr.bf16.mxu0 0
      %873 = vmatpush2.bf16.xpose.msra.mxu0 0
      %874 = vmatprep.subr.bf16.mxu0 0
      %875 = vmatpush2.bf16.xpose.msra.mxu0 0
      %876 = vmatprep.subr.bf16.mxu0 0
      %877 = vmatpush2.bf16.xpose.msra.mxu0 0
      %878 = vmatprep.subr.bf16.mxu0 0
      %879 = vmatpush2.bf16.xpose.msra.mxu0 0
      %880 = vmatprep.subr.bf16.mxu0 0
      %881 = vmatpush2.bf16.xpose.msra.mxu0 0
      %882 = vmatprep.subr.bf16.mxu0 0
      %883 = vmatpush2.bf16.xpose.msra.mxu0 0
      %884 = vmatprep.mubr.bf16.mxu0 0
      %885 = vmatmul.mubr.bf16.gmra.mxu0 %v841
      %v886 = vpop.f32.mrf.mxu0
      %v887 = vadd.f32 0.0, %v886
      %v888 = vpop.f32.mrf.mxu0
      %v889 = vpop.f32.mrf.mxu0
      %v890 = vadd.f32 0.0, %v889
      %v891 = vpop.f32.mrf.mxu0
      %892 = vmatprep.mubr.bf16.mxu0 0
      %893 = vmatmul.mubr.bf16.gmra.mxu0 %v844
      %v894 = vpop.f32.mrf.mxu0
      %v895 = vadd.f32 0.0, %v894
      %v896 = vpop.f32.mrf.mxu0
      %v897 = vpop.f32.mrf.mxu0
      %v898 = vadd.f32 0.0, %v897
      %v899 = vpop.f32.mrf.mxu0
      %900 = vmatprep.mubr.bf16.mxu0 0
      %901 = vmatmul.mubr.bf16.gmra.mxu0 %v847
      %v902 = vpop.f32.mrf.mxu0
      %v903 = vadd.f32 0.0, %v902
      %v904 = vpop.f32.mrf.mxu0
      %v905 = vpop.f32.mrf.mxu0
      %v906 = vadd.f32 0.0, %v905
      %v907 = vpop.f32.mrf.mxu0
      %908 = vmatprep.mubr.bf16.mxu0 0
      %909 = vmatmul.mubr.bf16.gmra.mxu0 %v850
      %v910 = vpop.f32.mrf.mxu0
      %v911 = vadd.f32 0.0, %v910
      %v912 = vpop.f32.mrf.mxu0
      %v913 = vpop.f32.mrf.mxu0
      %v914 = vadd.f32 0.0, %v913
      %v915 = vpop.f32.mrf.mxu0
      %916 = vdwg.mxu0
      %v917 = vsel %vm645, %v887, -inf
      %918 = vmax.xlane.f32.xlu0 %v917
      %v919 = vpop.xlane.xlu0 %918
      %v920 = vsel %vm645, %v890, -inf
      %921 = vmax.xlane.f32.xlu0 %v920
      %v922 = vpop.xlane.xlu0 %921
      %v923 = vsel %vm645, %v895, -inf
      %924 = vmax.xlane.f32.xlu0 %v923
      %v925 = vpop.xlane.xlu0 %924
      %v926 = vsel %vm645, %v898, -inf
      %927 = vmax.xlane.f32.xlu0 %v926
      %v928 = vpop.xlane.xlu0 %927
      %v929 = vsel %vm645, %v903, -inf
      %930 = vmax.xlane.f32.xlu0 %v929
      %v931 = vpop.xlane.xlu0 %930
      %v932 = vsel %vm645, %v906, -inf
      %933 = vmax.xlane.f32.xlu0 %v932
      %v934 = vpop.xlane.xlu0 %933
      %v935 = vsel %vm645, %v911, -inf
      %936 = vmax.xlane.f32.xlu0 %v935
      %v937 = vpop.xlane.xlu0 %936
      %v938 = vsel %vm645, %v914, -inf
      %939 = vmax.xlane.f32.xlu0 %v938
      %v940 = vpop.xlane.xlu0 %939
      %v941 = vsub.f32 %v887, %v919
      %v942 = vsub.f32 %v890, %v922
      %v943 = vsub.f32 %v895, %v925
      %v944 = vsub.f32 %v898, %v928
      %v945 = vsub.f32 %v903, %v931
      %v946 = vsub.f32 %v906, %v934
      %v947 = vsub.f32 %v911, %v937
      %v948 = vsub.f32 %v914, %v940
      %v949 = vmul.f32 %v941, 1.442695
      %v950 = vpow.pop %v949
      %v951 = vmul.f32 %v942, 1.442695
      %v952 = vpow.pop %v951
      %v953 = vmul.f32 %v943, 1.442695
      %v954 = vpow.pop %v953
      %v955 = vmul.f32 %v944, 1.442695
      %v956 = vpow.pop %v955
      %v957 = vmul.f32 %v945, 1.442695
      %v958 = vpow.pop %v957
      %v959 = vmul.f32 %v946, 1.442695
      %v960 = vpow.pop %v959
      %v961 = vmul.f32 %v947, 1.442695
      %v962 = vpow.pop %v961
      %v963 = vmul.f32 %v948, 1.442695
      %v964 = vpow.pop %v963
      %v965 = vsel %vm645, %v950, 0.0
      %966 = vadd.xlane.f32.xlu0 %v965
      %v967 = vpop.xlane.xlu0 %966
      %v968 = vsel %vm645, %v952, 0.0
      %969 = vadd.xlane.f32.xlu0 %v968
      %v970 = vpop.xlane.xlu0 %969
      %v971 = vsel %vm645, %v954, 0.0
      %972 = vadd.xlane.f32.xlu0 %v971
      %v973 = vpop.xlane.xlu0 %972
      %v974 = vsel %vm645, %v956, 0.0
      %975 = vadd.xlane.f32.xlu0 %v974
      %v976 = vpop.xlane.xlu0 %975
      %v977 = vsel %vm645, %v958, 0.0
      %978 = vadd.xlane.f32.xlu0 %v977
      %v979 = vpop.xlane.xlu0 %978
      %v980 = vsel %vm645, %v960, 0.0
      %981 = vadd.xlane.f32.xlu0 %v980
      %v982 = vpop.xlane.xlu0 %981
      %v983 = vsel %vm645, %v962, 0.0
      %984 = vadd.xlane.f32.xlu0 %v983
      %v985 = vpop.xlane.xlu0 %984
      %v986 = vsel %vm645, %v964, 0.0
      %987 = vadd.xlane.f32.xlu0 %v986
      %v988 = vpop.xlane.xlu0 %987
      %v989 = vrcp.pop %v967
      %v990 = vrcp.pop %v970
      %v991 = vrcp.pop %v973
      %v992 = vrcp.pop %v976
      %v993 = vrcp.pop %v979
      %v994 = vrcp.pop %v982
      %v995 = vrcp.pop %v985
      %v996 = vrcp.pop %v988
      %v997 = vmul.f32 %v950, %v989
      %v998 = vmul.f32 %v952, %v990
      %v999 = vmul.f32 %v954, %v991
      %v1000 = vmul.f32 %v956, %v992
      %v1001 = vmul.f32 %v958, %v993
      %v1002 = vmul.f32 %v960, %v994
      %v1003 = vmul.f32 %v962, %v995
      %v1004 = vmul.f32 %v964, %v996
      %v1005 = vpack.c.bf16 %v998, %v997
      %v1006 = vpack.c.bf16 %v1000, %v999
      %v1007 = vpack.c.bf16 %v1002, %v1001
      %v1008 = vpack.c.bf16 %v1004, %v1003
      %v1010 = vsel %vm645, %v1005, 0
      %v1013 = vsel %vm645, %v1006, 0
      %v1016 = vsel %vm645, %v1007, 0
      %v1019 = vsel %vm645, %v1008, 0
      %1021 = vmatprep.subr.bf16.mxu0 0
      %1022 = vmatpush1.bf16.msra.mxu0 0
      %1023 = vmatprep.subr.bf16.mxu0 0
      %1024 = vmatpush1.bf16.msra.mxu0 0
      %1025 = vmatprep.subr.bf16.mxu0 0
      %1026 = vmatpush1.bf16.msra.mxu0 0
      %1027 = vmatprep.subr.bf16.mxu0 0
      %1028 = vmatpush1.bf16.msra.mxu0 0
      %1029 = vmatprep.subr.bf16.mxu0 0
      %1030 = vmatpush1.bf16.msra.mxu0 %v567
      %1031 = vmatprep.subr.bf16.mxu0 0
      %1032 = vmatpush1.bf16.msra.mxu0 %v566
      %1033 = vmatprep.subr.bf16.mxu0 0
      %1034 = vmatpush1.bf16.msra.mxu0 %v565
      %1035 = vmatprep.subr.bf16.mxu0 0
      %1036 = vmatpush1.bf16.msra.mxu0 %v564
      %1037 = vmatprep.subr.bf16.mxu0 0
      %1038 = vmatpush2.bf16.msra.mxu0 0
      %1039 = vmatprep.subr.bf16.mxu0 0
      %1040 = vmatpush2.bf16.msra.mxu0 0
      %1041 = vmatprep.subr.bf16.mxu0 0
      %1042 = vmatpush2.bf16.msra.mxu0 0
      %1043 = vmatprep.subr.bf16.mxu0 0
      %1044 = vmatpush2.bf16.msra.mxu0 0
      %1045 = vmatprep.subr.bf16.mxu0 0
      %1046 = vmatpush2.bf16.msra.mxu0 0
      %1047 = vmatprep.subr.bf16.mxu0 0
      %1048 = vmatpush2.bf16.msra.mxu0 0
      %1049 = vmatprep.subr.bf16.mxu0 0
      %1050 = vmatpush2.bf16.msra.mxu0 0
      %1051 = vmatprep.subr.bf16.mxu0 0
      %1052 = vmatpush2.bf16.msra.mxu0 0
      %1053 = vmatprep.mubr.bf16.mxu0 0
      %1054 = vmatmul.mubr.bf16.gmra.mxu0 %v1010
      %v1055 = vpop.f32.mrf.mxu0
      %v1056 = vadd.f32 0.0, %v1055
      %v1057 = vpop.f32.mrf.mxu0
      %v1058 = vpop.f32.mrf.mxu0
      %v1059 = vadd.f32 0.0, %v1058
      %v1060 = vpop.f32.mrf.mxu0
      %1061 = vmatprep.mubr.bf16.mxu0 0
      %1062 = vmatmul.mubr.bf16.gmra.mxu0 %v1013
      %v1063 = vpop.f32.mrf.mxu0
      %v1064 = vadd.f32 0.0, %v1063
      %v1065 = vpop.f32.mrf.mxu0
      %v1066 = vpop.f32.mrf.mxu0
      %v1067 = vadd.f32 0.0, %v1066
      %v1068 = vpop.f32.mrf.mxu0
      %1069 = vmatprep.mubr.bf16.mxu0 0
      %1070 = vmatmul.mubr.bf16.gmra.mxu0 %v1016
      %v1071 = vpop.f32.mrf.mxu0
      %v1072 = vadd.f32 0.0, %v1071
      %v1073 = vpop.f32.mrf.mxu0
      %v1074 = vpop.f32.mrf.mxu0
      %v1075 = vadd.f32 0.0, %v1074
      %v1076 = vpop.f32.mrf.mxu0
      %1077 = vmatprep.mubr.bf16.mxu0 0
      %1078 = vmatmul.mubr.bf16.gmra.mxu0 %v1019
      %v1079 = vpop.f32.mrf.mxu0
      %v1080 = vadd.f32 0.0, %v1079
      %v1081 = vpop.f32.mrf.mxu0
      %v1082 = vpop.f32.mrf.mxu0
      %v1083 = vadd.f32 0.0, %v1082
      %v1084 = vpop.f32.mrf.mxu0
      %1085 = vdwg.mxu0
      %v1086 = vmul.f32 %v815, %v1056
      %v1087 = vmul.f32 %v815, %v1059
      %v1088 = vmul.f32 %v815, %v1064
      %v1089 = vmul.f32 %v815, %v1067
      %v1090 = vmul.f32 %v815, %v1072
      %v1091 = vmul.f32 %v815, %v1075
      %v1092 = vmul.f32 %v815, %v1080
      %v1093 = vmul.f32 %v815, %v1083
      %v1094 = vadd.f32 %v1086, %v271
      %v1095 = vadd.f32 %v1087, %v272
      %v1096 = vadd.f32 %v1088, %v273
      %v1097 = vadd.f32 %v1089, %v274
      %v1098 = vadd.f32 %v1090, %v275
      %v1099 = vadd.f32 %v1091, %v276
      %v1100 = vadd.f32 %v1092, %v277
      %v1101 = vadd.f32 %v1093, %v278
      %s1102 = scalar_lea.vmem %s259, 64
      %1103 = vst.msk [vmem:[%s1102] sm:$0xff] %vm310, %v1094
      %1104 = vst.msk [vmem:[%s1102 + $0x8] sm:$0xff] %vm310, %v1095
      %1105 = vst.msk [vmem:[%s1102 + $0x10] sm:$0xff] %vm310, %v1096
      %1106 = vst.msk [vmem:[%s1102 + $0x18] sm:$0xff] %vm310, %v1097
      %1107 = vst.msk [vmem:[%s1102 + $0x20] sm:$0xff] %vm310, %v1098
      %1108 = vst.msk [vmem:[%s1102 + $0x28] sm:$0xff] %vm310, %v1099
      %1109 = vst.msk [vmem:[%s1102 + $0x30] sm:$0xff] %vm310, %v1100
      %1110 = vst.msk [vmem:[%s1102 + $0x38] sm:$0xff] %vm310, %v1101
      %s1111 = smul.u32 2, %s18
      %p1112 = scmp.lt.s32.totalorder %s1111, 3
      %s1113 = scalar_select %p1112, %s1111, 3
      %s1114 = smul.addr %s1113, 8
      %s1115 = smul.addr %s1114, 8
      %s1116 = scalar_lea.vmem %s6, %s1115
      // Predicated region
      $region45: #{tpu_custom_call.1} parent=43 // pred_check
        %p1117 = pneg %p167
      $region46: #{tpu_custom_call.1} parent=43 // pred_check_branch
        %1119 = sbr.rel (%p1117) target = $region48
      $region47: #{tpu_custom_call.1} parent=43 // pred_region
        %s1120 = smul.u32 2, %s18
      $region48: #{tpu_custom_call.1} parent=43 // pred_fallthru
        _
    $region44: #{tpu_custom_call.1} parent=5 // pred_fallthru
      _
    %p1121 = scmp.le.s32.totalorder 2, %s13
    // Predicated region
    $region49: #{tpu_custom_call.1} parent=5 // pred_check
      %p1122 = pneg %p1121
    $region50: #{tpu_custom_call.1} parent=5 // pred_check_branch
      %1124 = sbr.rel (%p1122) target = $region52
    $region51: #{tpu_custom_call.1} parent=5 // pred_region
      %s1125 = ssub.s32 %s13, 2
      // Predicated region
      $region53: #{tpu_custom_call.1} parent=51 // pred_check
        %p1126 = pneg %p173
      $region54: #{tpu_custom_call.1} parent=51 // pred_check_branch
        %1128 = sbr.rel (%p1126) target = $region56
      $region55: #{tpu_custom_call.1} parent=51 // pred_region
        %s1129 = smul.u32 2, %s19
        %p1130 = scmp.lt.s32.totalorder %s1129, 3
        %s1131 = scalar_select %p1130, %s1129, 3
        %s1132 = smul.addr %s1131, 8
        %s1133 = smul.addr %s1132, 8
        %s1134 = scalar_lea.vmem %s6, %s1133
      $region56: #{tpu_custom_call.1} parent=51 // pred_fallthru
        _
    $region52: #{tpu_custom_call.1} parent=5 // pred_fallthru
      _
  $region6: #{tpu_custom_call.1} parent=0 // loop_footer
    %s17 = sadd.s32 1, %s13
  $region7: #{tpu_custom_call.1} parent=0 // loop_footer_branch
    %12 = sbr.rel target = $region3
  $region8: #{tpu_custom_call.1} parent=0 // loop_exit
    _

</llo_original>
